<compile_context>
chip_gen: v7x
topology: tpu7x:2x2x1
jax: 0.10.0
libtpu: 0.0.40
codegen_flags: <defaults>
</compile_context>

<pallas_src>
import functools

import jax
import jax.numpy as jnp
from jax.experimental import pallas as pl
from jax.experimental.pallas import tpu as pltpu


def _round_up(v, m):
    return ((v + m - 1) // m) * m


def _vmem_capacity_bytes():
    # Per-generation VMEM: 128 MiB on v5e/v6e, 64 MiB per TC on v7x.
    try:
        return int(pltpu.get_tpu_info().vmem_capacity_bytes)
    except Exception:
        return 64 * 1024 * 1024  # conservative (v7x per-TensorCore)


# --------------------------------------------------------------------------
# Kernel A: weights resident in VMEM, 1-D grid over row tiles.
# --------------------------------------------------------------------------
def _mlp_resident_kernel(x_ref, w1_ref, b1_ref, w2_ref, b2_ref, o_ref, *,
                         approx_gelu):
    # x_ref: (tm, C_in)  w1_ref: (C_in, H)  b1_ref: (1, H)
    # w2_ref: (H, C_out) b2_ref: (1, C_out) o_ref: (tm, C_out)
    h = jnp.dot(x_ref[...], w1_ref[...], preferred_element_type=jnp.float32)
    h = h + b1_ref[...].astype(jnp.float32)
    h = jax.nn.gelu(h, approximate=approx_gelu)
    y = jnp.dot(h.astype(w2_ref.dtype), w2_ref[...],
                preferred_element_type=jnp.float32)
    o_ref[...] = (y + b2_ref[...].astype(jnp.float32)).astype(o_ref.dtype)


# --------------------------------------------------------------------------
# Kernel B: hidden dim streamed in chunks, fp32 accumulator resident in VMEM.
# --------------------------------------------------------------------------
def _mlp_streaming_kernel(x_ref, w1_ref, b1_ref, w2_ref, b2_ref, o_ref,
                          acc_ref, *, approx_gelu):
    j = pl.program_id(1)

    @pl.when(j == 0)
    def _init():
        acc_ref[...] = jnp.zeros_like(acc_ref)

    h = jnp.dot(x_ref[...], w1_ref[...], preferred_element_type=jnp.float32)
    h = h + b1_ref[...].astype(jnp.float32)
    h = jax.nn.gelu(h, approximate=approx_gelu)
    acc_ref[...] += jnp.dot(h.astype(w2_ref.dtype), w2_ref[...],
                            preferred_element_type=jnp.float32)

    @pl.when(j == pl.num_programs(1) - 1)
    def _finalize():
        y = acc_ref[...] + b2_ref[...].astype(jnp.float32)
        o_ref[...] = y.astype(o_ref.dtype)


# --------------------------------------------------------------------------
# Wrapper
# --------------------------------------------------------------------------
def mlp_pallas(x, w1, b1, w2, b2, *, compute_dtype=jnp.bfloat16,
               gelu_approx=None):
    """x: (B, N, C_in); w1: (C_in, H); b1: (H,); w2: (H, C_out); b2: (C_out,).

    compute_dtype: dtype for x/W1/W2 fed to the MXU (default bf16).
    Accumulation, biases and GELU stay fp32.  Pass jnp.float32 for a
    strict-tolerance path (also switches GELU back to exact erf by default).
    """
    B, N, C_in = x.shape
    H = w1.shape[1]
    C_out = w2.shape[1]
    M = B * N
    out_dtype = x.dtype

    if compute_dtype is None:
        compute_dtype = jnp.bfloat16
    cbytes = jnp.dtype(compute_dtype).itemsize
    obytes = jnp.dtype(out_dtype).itemsize
    if gelu_approx is None:
        # tanh GELU on the bf16 path (EUP), exact erf on the fp32 path.
        gelu_approx = jnp.dtype(compute_dtype) != jnp.dtype(jnp.float32)

    # ---- lane-dense (128) channel padding; exact by construction:
    #      padded input cols meet zero weight rows, padded hidden cols have
    #      zero weights+bias (gelu(0)=0) and zero W2 rows, padded output cols
    #      are sliced off.
    C_in_p = _round_up(C_in, 128)
    C_out_p = _round_up(C_out, 128)
    H_p128 = _round_up(H, 128)
    M8 = _round_up(M, 8)

    # ---- per-generation VMEM budget.
    vmem_cap = _vmem_capacity_bytes()
    budget = int(vmem_cap * 0.70)          # for tile sizing (compiler headroom)
    vmem_limit = int(vmem_cap * 0.90)      # scoped VMEM limit for Mosaic

    # ---- mode selection: weights resident if padded W1+W2 (double-buffered,
    #      compute dtype) plus a minimal row tile fit the budget.
    w_resident_bytes = 2 * (C_in_p * H_p128 + H_p128 * C_out_p) * cbytes

    def _resident_tile_bytes(tm):
        x_tile = 2 * tm * C_in_p * cbytes
        o_tile = 2 * tm * C_out_p * obytes
        bias = 2 * (H_p128 + C_out_p) * 4
        inter = tm * H_p128 * (4 + cbytes)   # fp32 h + bf16 cast for 2nd matmul
        return x_tile + o_tile + bias + inter

    tm_min = min(128, M8)
    use_resident = (w_resident_bytes + _resident_tile_bytes(tm_min)) <= budget

    if use_resident:
        H_p = H_p128
        th = H_p  # single chunk (unused by kernel A)
        tm = 8
        for cand in (512, 256, 128, 64, 32, 16, 8):
            if cand <= M8 and (w_resident_bytes + _resident_tile_bytes(cand)) <= budget:
                tm = cand
                break
    else:
        # Streaming: keep th = 512 (pad H up rather than shrinking th).
        th = min(512, H_p128)
        H_p = _round_up(H, th)

        def _streaming_tile_bytes(tm):
            x_tile = 2 * tm * C_in_p * cbytes
            w1_tile = 2 * C_in_p * th * cbytes
            w2_tile = 2 * th * C_out_p * cbytes
            bias = 2 * (th + C_out_p) * 4
            o_tile = 2 * tm * C_out_p * obytes
            acc = tm * C_out_p * 4
            inter = tm * th * (4 + cbytes)
            return x_tile + w1_tile + w2_tile + bias + o_tile + acc + inter

        tm = 8
        for cand in (1024, 512, 256, 128, 64, 32, 16, 8):
            if cand <= M8 and _streaming_tile_bytes(cand) <= budget:
                tm = cand
                break

    # ---- megacore (v7x): make sure the parallel M axis has >= 2 tiles.
    while tm > 8 and _round_up(M, tm) // tm < 2:
        tm //= 2
    M_p = _round_up(M, tm)

    # ---- padding / casting (conditional: no-op copies avoided when aligned).
    x2d = x.reshape(M, C_in)
    if (M_p, C_in_p) != (M, C_in):
        x2d = jnp.pad(x2d, ((0, M_p - M), (0, C_in_p - C_in)))
    w1p = w1 if (C_in_p, H_p) == (C_in, H) else jnp.pad(
        w1, ((0, C_in_p - C_in), (0, H_p - H)))
    w2p = w2 if (H_p, C_out_p) == (H, C_out) else jnp.pad(
        w2, ((0, H_p - H), (0, C_out_p - C_out)))
    b1p = (b1 if H_p == H else jnp.pad(b1, (0, H_p - H))).reshape(1, H_p)
    b2p = (b2 if C_out_p == C_out else jnp.pad(b2, (0, C_out_p - C_out))
           ).reshape(1, C_out_p)

    x2d = x2d.astype(compute_dtype)
    w1p = w1p.astype(compute_dtype)
    w2p = w2p.astype(compute_dtype)
    # biases stay fp32 (added on the fp32 accumulator).

    if use_resident:
        kernel = functools.partial(_mlp_resident_kernel, approx_gelu=gelu_approx)
        out2d = pl.pallas_call(
            kernel,
            out_shape=jax.ShapeDtypeStruct((M_p, C_out_p), out_dtype),
            grid_spec=pltpu.PrefetchScalarGridSpec(
                num_scalar_prefetch=0,
                grid=(M_p // tm,),
                in_specs=[
                    pl.BlockSpec((tm, C_in_p), lambda i: (i, 0)),     # x row tile
                    pl.BlockSpec((C_in_p, H_p), lambda i: (0, 0)),    # W1 resident
                    pl.BlockSpec((1, H_p), lambda i: (0, 0)),         # b1 resident
                    pl.BlockSpec((H_p, C_out_p), lambda i: (0, 0)),   # W2 resident
                    pl.BlockSpec((1, C_out_p), lambda i: (0, 0)),     # b2 resident
                ],
                out_specs=pl.BlockSpec((tm, C_out_p), lambda i: (i, 0)),
            ),
            compiler_params=pltpu.CompilerParams(
                dimension_semantics=("parallel",),
                vmem_limit_bytes=vmem_limit,
            ),
        )(x2d, w1p, b1p, w2p, b2p)
    else:
        kernel = functools.partial(_mlp_streaming_kernel, approx_gelu=gelu_approx)
        out2d = pl.pallas_call(
            kernel,
            out_shape=jax.ShapeDtypeStruct((M_p, C_out_p), out_dtype),
            grid_spec=pltpu.PrefetchScalarGridSpec(
                num_scalar_prefetch=0,
                grid=(M_p // tm, H_p // th),
                in_specs=[
                    pl.BlockSpec((tm, C_in_p), lambda i, j: (i, 0)),   # x row tile
                    pl.BlockSpec((C_in_p, th), lambda i, j: (0, j)),   # W1 H-chunk
                    pl.BlockSpec((1, th), lambda i, j: (0, j)),        # b1 H-chunk
                    pl.BlockSpec((th, C_out_p), lambda i, j: (j, 0)),  # W2 H-chunk
                    pl.BlockSpec((1, C_out_p), lambda i, j: (0, 0)),   # b2
                ],
                out_specs=pl.BlockSpec((tm, C_out_p), lambda i, j: (i, 0)),
                scratch_shapes=[pltpu.VMEM((tm, C_out_p), jnp.float32)],
            ),
            compiler_params=pltpu.CompilerParams(
                dimension_semantics=("parallel", "arbitrary"),
                vmem_limit_bytes=vmem_limit,
            ),
        )(x2d, w1p, b1p, w2p, b2p)

    out = out2d
    if (M_p, C_out_p) != (M, C_out):
        out = out2d[:M, :C_out]
    return out.reshape(B, N, C_out)


def _reference_mlp(x, w1, b1, w2, b2):
    h = jax.nn.gelu(jnp.einsum("bnc,ch->bnh", x, w1) + b1, approximate=False)
    return jnp.einsum("bnh,ho->bno", h, w2) + b2


if __name__ == "__main__":
    # Small shapes consistent with the module: tokens (B, N, C_in).
    B, N = 2, 8
    in_features, hidden_features, out_features = 32, 64, 32

    key = jax.random.PRNGKey(0)
    kx, kw1, kb1, kw2, kb2 = jax.random.split(key, 5)

    x = jax.random.normal(kx, (B, N, in_features), dtype=jnp.float32)

    # Deterministic "Linear-like" init (uniform in +-1/sqrt(fan_in)).
    lim1 = 1.0 / (in_features ** 0.5)
    lim2 = 1.0 / (hidden_features ** 0.5)
    # Weights stored transposed vs. PyTorch: (in, out) so kernel does x @ W.
    w1 = jax.random.uniform(kw1, (in_features, hidden_features),
                            minval=-lim1, maxval=lim1, dtype=jnp.float32)
    b1 = jax.random.uniform(kb1, (hidden_features,),
                            minval=-lim1, maxval=lim1, dtype=jnp.float32)
    w2 = jax.random.uniform(kw2, (hidden_features, out_features),
                            minval=-lim2, maxval=lim2, dtype=jnp.float32)
    b2 = jax.random.uniform(kb2, (out_features,),
                            minval=-lim2, maxval=lim2, dtype=jnp.float32)

    ref = _reference_mlp(x, w1, b1, w2, b2)

    # Default (bf16 compute, tanh GELU) path — performance default.
    fn_bf16 = jax.jit(mlp_pallas)
    out_bf16 = jax.block_until_ready(fn_bf16(x, w1, b1, w2, b2))
    assert out_bf16.shape == (B, N, out_features)
    assert jnp.allclose(out_bf16, ref, atol=5e-2, rtol=5e-2), \
        "bf16 path mismatch vs reference"

    # Strict fp32 path (exact erf GELU) — tight tolerance.
    fn_f32 = jax.jit(functools.partial(mlp_pallas, compute_dtype=jnp.float32))
    out_f32 = jax.block_until_ready(fn_f32(x, w1, b1, w2, b2))
    assert jnp.allclose(out_f32, ref, atol=1e-5, rtol=1e-5), \
        "fp32 path mismatch vs reference"

    print("KERNEL_OK")
</pallas_src>

<mosaic_0001>
module attributes {stable_mosaic.version = 11 : i64} {
  func.func @_mlp_resident_kernel(%arg0: i32, %arg1: memref<8x128xbf16, #tpu.memory_space<vmem>>, %arg2: memref<128x128xbf16, #tpu.memory_space<vmem>>, %arg3: memref<1x128xf32, #tpu.memory_space<vmem>>, %arg4: memref<128x128xbf16, #tpu.memory_space<vmem>>, %arg5: memref<1x128xf32, #tpu.memory_space<vmem>>, %arg6: memref<8x128xf32, #tpu.memory_space<vmem>>) attributes {dimension_semantics = [#tpu.dimension_semantics<parallel>], iteration_bounds = array<i64: 2>, scalar_prefetch = 0 : i64, scratch_operands = 0 : i64, tpu.core_type = #tpu.core_type<tc>, window_params = [{transform_indices = @transform_0, window_bounds = array<i64: 8, 128>}, {pipeline_mode = #tpu.pipeline_mode<synchronous>, transform_indices = @transform_1, window_bounds = array<i64: 128, 128>}, {pipeline_mode = #tpu.pipeline_mode<synchronous>, transform_indices = @transform_2, window_bounds = array<i64: 1, 128>}, {pipeline_mode = #tpu.pipeline_mode<synchronous>, transform_indices = @transform_3, window_bounds = array<i64: 128, 128>}, {pipeline_mode = #tpu.pipeline_mode<synchronous>, transform_indices = @transform_4, window_bounds = array<i64: 1, 128>}, {transform_indices = @transform_5, window_bounds = array<i64: 8, 128>}]} {
    %c0 = arith.constant 0 : index
    %c0_0 = arith.constant 0 : index
    %0 = vector.load %arg1[%c0, %c0_0] : memref<8x128xbf16, #tpu.memory_space<vmem>>, vector<8x128xbf16>
    %c0_1 = arith.constant 0 : index
    %c0_2 = arith.constant 0 : index
    %1 = vector.load %arg2[%c0_1, %c0_2] : memref<128x128xbf16, #tpu.memory_space<vmem>>, vector<128x128xbf16>
    %cst = arith.constant dense<0.000000e+00> : vector<8x128xf32>
    %2 = tpu.matmul %0, %1, %cst {dimension_numbers = #tpu.dot_dimension_numbers<[1], [0], [0], [1], [0, 0, 1, 1], [], []>} : vector<8x128xbf16>, vector<128x128xbf16>, vector<8x128xf32> -> vector<8x128xf32>
    %c0_3 = arith.constant 0 : index
    %c0_4 = arith.constant 0 : index
    %3 = vector.load %arg3[%c0_3, %c0_4] : memref<1x128xf32, #tpu.memory_space<vmem>>, vector<1x128xf32>
    %4 = vector.broadcast %3 : vector<1x128xf32> to vector<8x128xf32>
    %5 = arith.addf %2, %4 : vector<8x128xf32>
    %6 = arith.mulf %5, %5 : vector<8x128xf32>
    %7 = arith.mulf %5, %6 : vector<8x128xf32>
    %cst_5 = arith.constant 4.471500e-02 : f32
    %8 = vector.broadcast %cst_5 : f32 to vector<8x128xf32>
    %9 = arith.mulf %8, %7 : vector<8x128xf32>
    %10 = arith.addf %5, %9 : vector<8x128xf32>
    %cst_6 = arith.constant 0.797884583 : f32
    %11 = vector.broadcast %cst_6 : f32 to vector<8x128xf32>
    %12 = arith.mulf %11, %10 : vector<8x128xf32>
    %13 = math.tanh %12 : vector<8x128xf32>
    %cst_7 = arith.constant 1.000000e+00 : f32
    %14 = vector.broadcast %cst_7 : f32 to vector<8x128xf32>
    %15 = arith.addf %14, %13 : vector<8x128xf32>
    %cst_8 = arith.constant 5.000000e-01 : f32
    %16 = vector.broadcast %cst_8 : f32 to vector<8x128xf32>
    %17 = arith.mulf %16, %15 : vector<8x128xf32>
    %18 = arith.mulf %5, %17 : vector<8x128xf32>
    %19 = arith.truncf %18 : vector<8x128xf32> to vector<8x128xbf16>
    %c0_9 = arith.constant 0 : index
    %c0_10 = arith.constant 0 : index
    %20 = vector.load %arg4[%c0_9, %c0_10] : memref<128x128xbf16, #tpu.memory_space<vmem>>, vector<128x128xbf16>
    %cst_11 = arith.constant dense<0.000000e+00> : vector<8x128xf32>
    %21 = tpu.matmul %19, %20, %cst_11 {dimension_numbers = #tpu.dot_dimension_numbers<[1], [0], [0], [1], [0, 0, 1, 1], [], []>} : vector<8x128xbf16>, vector<128x128xbf16>, vector<8x128xf32> -> vector<8x128xf32>
    %c0_12 = arith.constant 0 : index
    %c0_13 = arith.constant 0 : index
    %22 = vector.load %arg5[%c0_12, %c0_13] : memref<1x128xf32, #tpu.memory_space<vmem>>, vector<1x128xf32>
    %23 = vector.broadcast %22 : vector<1x128xf32> to vector<8x128xf32>
    %24 = arith.addf %21, %23 : vector<8x128xf32>
    %c0_14 = arith.constant 0 : index
    %c0_15 = arith.constant 0 : index
    %25 = vector.load %arg6[%c0_14, %c0_15] : memref<8x128xf32, #tpu.memory_space<vmem>>, vector<8x128xf32>
    tpu.vector_store %arg6[%c0_14, %c0_15], %24 {strides = array<i32>} : memref<8x128xf32, #tpu.memory_space<vmem>>, vector<8x128xf32>,
    return
  }
  func.func @transform_0(%arg0: i32) -> (i32, i32) {
    %c0_i32 = arith.constant 0 : i32
    %c0_i32_0 = arith.constant 0 : i32
    return %arg0, %c0_i32 : i32, i32
  }
  func.func @transform_1(%arg0: i32) -> (i32, i32) {
    %c0_i32 = arith.constant 0 : i32
    %c0_i32_0 = arith.constant 0 : i32
    %c0_i32_1 = arith.constant 0 : i32
    return %c0_i32, %c0_i32_0 : i32, i32
  }
  func.func @transform_2(%arg0: i32) -> (i32, i32) {
    %c0_i32 = arith.constant 0 : i32
    %c0_i32_0 = arith.constant 0 : i32
    %c0_i32_1 = arith.constant 0 : i32
    return %c0_i32, %c0_i32_0 : i32, i32
  }
  func.func @transform_3(%arg0: i32) -> (i32, i32) {
    %c0_i32 = arith.constant 0 : i32
    %c0_i32_0 = arith.constant 0 : i32
    %c0_i32_1 = arith.constant 0 : i32
    return %c0_i32, %c0_i32_0 : i32, i32
  }
  func.func @transform_4(%arg0: i32) -> (i32, i32) {
    %c0_i32 = arith.constant 0 : i32
    %c0_i32_0 = arith.constant 0 : i32
    %c0_i32_1 = arith.constant 0 : i32
    return %c0_i32, %c0_i32_0 : i32, i32
  }
  func.func @transform_5(%arg0: i32) -> (i32, i32) {
    %c0_i32 = arith.constant 0 : i32
    %c0_i32_0 = arith.constant 0 : i32
    return %arg0, %c0_i32 : i32, i32
  }
}

</mosaic_0001>

<llo_original>
// kernel: mlp_pallas.1
$region0: #{mlp_pallas.1}
  #allocation0 [shape = 'u32[]', space=smem, size = 0x4, offset = 0x4, fixed_abs, tag = 'smem constant byte address 0x4 - core index']
  #allocation1 [shape = 'u32[144,128]{1,0:T(1,128)}', space=vmem, size = 0x12000, scoped, tag = 'internal scratch']
  %s0 = inlined_call_operand.vmem [shape: bf16[16,128], index: 0, kind: input, shape index: {}]
  %s1 = inlined_call_operand.vmem [shape: bf16[128,128], index: 1, kind: input, shape index: {}]
  %s2 = inlined_call_operand.vmem [shape: f32[1,128], index: 2, kind: input, shape index: {}]
  %s3 = inlined_call_operand.vmem [shape: bf16[128,128], index: 3, kind: input, shape index: {}]
  %s4 = inlined_call_operand.vmem [shape: f32[1,128], index: 4, kind: input, shape index: {}]
  %s5 = inlined_call_operand.vmem [shape: f32[16,128], index: 5, kind: output, shape index: {}]
  %s6 = sld [smem:[#allocation0]]
  $region53: #{mlp_pallas.1} parent=0
    _
  %s8 = ssub.s32 1, %s6
  %s9 = scalar_select 0, %s8, %s6
  loop: start=0, step=1, limit=4
  $region2: #{mlp_pallas.1} parent=0 // loop_pre_header
    _
  $region3: #{mlp_pallas.1} parent=0 // loop_header
    %s11 = sphi 0, %s15
    %p12 = scmp.ge.s32.totalorder %s11, 4
    %s21 = sphi 0, %s23
    %s24 = sphi 0, %s21
    %s25 = sphi 0, %s24
    %s41 = sphi 0, %s25
    %s45 = sphi 0, %s45
    %s47 = sphi 0, %s45
    %s48 = sphi 0, %s47
    %s62 = sphi 0, %s48
    %s66 = sphi 0, %s66
    %s68 = sphi 0, %s66
    %s69 = sphi 0, %s68
    %s83 = sphi 0, %s69
    %s87 = sphi 0, %s87
    %s89 = sphi 0, %s87
    %s90 = sphi 0, %s89
    %s104 = sphi 0, %s90
    %s108 = sphi 0, %s108
    %s110 = sphi 0, %s108
    %s111 = sphi 0, %s110
    %s125 = sphi 0, %s111
    %s131 = sphi 0, %s133
    %s134 = sphi 0, %s131
    %s135 = sphi 0, %s134
    %s151 = sphi 0, %s135
  $region4: #{mlp_pallas.1} parent=0 // loop_header_branch
    %14 = sbr.rel (%p12) target = $region8
  $region5: #{mlp_pallas.1} parent=0 // loop_body
    %s16 = ssub.s32 %s11, 1
    %s17 = ssub.s32 %s11, 2
    %s18 = sadd.s32 %s11, 1
    %s19 = ssub.s32 %s11, %s18
    %p20 = scmp.eq.s32.totalorder %s19, 0
    %s22 = sadd.s32 %s21, 1
    %s23 = scalar_select %p20, %s21, %s22
    %p26 = pneg %p20
    %p27 = scmp.eq.s32.totalorder %s11, 1
    %p28 = por %p26, %p27
    %p29 = scmp.ne.s32.totalorder %s21, %s24
    %p30 = scmp.eq.s32.totalorder %s11, 0
    %p31 = por %p29, %p30
    %p32 = scmp.ne.s32.totalorder %s21, %s24
    %p33 = scmp.eq.s32.totalorder %s16, 1
    %p34 = por %p32, %p33
    %p35 = scmp.ne.s32.totalorder %s24, %s25
    %p36 = scmp.eq.s32.totalorder %s16, 0
    %p37 = por %p35, %p36
    %p38 = scmp.ne.s32.totalorder %s24, %s25
    %p39 = scmp.eq.s32.totalorder %s17, 1
    %p40 = por %p38, %p39
    %p42 = scmp.ne.s32.totalorder %s25, %s41
    %p43 = scmp.eq.s32.totalorder %s17, 0
    %p44 = por %p42, %p43
    %s46 = sadd.s32 %s45, 1
    %p49 = scmp.eq.s32.totalorder %s11, 1
    %p50 = scmp.ne.s32.totalorder %s45, %s47
    %p51 = scmp.eq.s32.totalorder %s11, 0
    %p52 = por %p50, %p51
    %p53 = scmp.ne.s32.totalorder %s45, %s47
    %p54 = scmp.eq.s32.totalorder %s16, 1
    %p55 = por %p53, %p54
    %p56 = scmp.ne.s32.totalorder %s47, %s48
    %p57 = scmp.eq.s32.totalorder %s16, 0
    %p58 = por %p56, %p57
    %p59 = scmp.ne.s32.totalorder %s47, %s48
    %p60 = scmp.eq.s32.totalorder %s17, 1
    %p61 = por %p59, %p60
    %p63 = scmp.ne.s32.totalorder %s48, %s62
    %p64 = scmp.eq.s32.totalorder %s17, 0
    %p65 = por %p63, %p64
    %s67 = sadd.s32 %s66, 1
    %p70 = scmp.eq.s32.totalorder %s11, 1
    %p71 = scmp.ne.s32.totalorder %s66, %s68
    %p72 = scmp.eq.s32.totalorder %s11, 0
    %p73 = por %p71, %p72
    %p74 = scmp.ne.s32.totalorder %s66, %s68
    %p75 = scmp.eq.s32.totalorder %s16, 1
    %p76 = por %p74, %p75
    %p77 = scmp.ne.s32.totalorder %s68, %s69
    %p78 = scmp.eq.s32.totalorder %s16, 0
    %p79 = por %p77, %p78
    %p80 = scmp.ne.s32.totalorder %s68, %s69
    %p81 = scmp.eq.s32.totalorder %s17, 1
    %p82 = por %p80, %p81
    %p84 = scmp.ne.s32.totalorder %s69, %s83
    %p85 = scmp.eq.s32.totalorder %s17, 0
    %p86 = por %p84, %p85
    %s88 = sadd.s32 %s87, 1
    %p91 = scmp.eq.s32.totalorder %s11, 1
    %p92 = scmp.ne.s32.totalorder %s87, %s89
    %p93 = scmp.eq.s32.totalorder %s11, 0
    %p94 = por %p92, %p93
    %p95 = scmp.ne.s32.totalorder %s87, %s89
    %p96 = scmp.eq.s32.totalorder %s16, 1
    %p97 = por %p95, %p96
    %p98 = scmp.ne.s32.totalorder %s89, %s90
    %p99 = scmp.eq.s32.totalorder %s16, 0
    %p100 = por %p98, %p99
    %p101 = scmp.ne.s32.totalorder %s89, %s90
    %p102 = scmp.eq.s32.totalorder %s17, 1
    %p103 = por %p101, %p102
    %p105 = scmp.ne.s32.totalorder %s90, %s104
    %p106 = scmp.eq.s32.totalorder %s17, 0
    %p107 = por %p105, %p106
    %s109 = sadd.s32 %s108, 1
    %p112 = scmp.eq.s32.totalorder %s11, 1
    %p113 = scmp.ne.s32.totalorder %s108, %s110
    %p114 = scmp.eq.s32.totalorder %s11, 0
    %p115 = por %p113, %p114
    %p116 = scmp.ne.s32.totalorder %s108, %s110
    %p117 = scmp.eq.s32.totalorder %s16, 1
    %p118 = por %p116, %p117
    %p119 = scmp.ne.s32.totalorder %s110, %s111
    %p120 = scmp.eq.s32.totalorder %s16, 0
    %p121 = por %p119, %p120
    %p122 = scmp.ne.s32.totalorder %s110, %s111
    %p123 = scmp.eq.s32.totalorder %s17, 1
    %p124 = por %p122, %p123
    %p126 = scmp.ne.s32.totalorder %s111, %s125
    %p127 = scmp.eq.s32.totalorder %s17, 0
    %p128 = por %p126, %p127
    %s129 = ssub.s32 %s11, %s18
    %p130 = scmp.eq.s32.totalorder %s129, 0
    %s132 = sadd.s32 %s131, 1
    %s133 = scalar_select %p130, %s131, %s132
    %p136 = pneg %p130
    %p137 = scmp.eq.s32.totalorder %s11, 1
    %p138 = por %p136, %p137
    %p139 = scmp.ne.s32.totalorder %s131, %s134
    %p140 = scmp.eq.s32.totalorder %s11, 0
    %p141 = por %p139, %p140
    %p142 = scmp.ne.s32.totalorder %s131, %s134
    %p143 = scmp.eq.s32.totalorder %s16, 1
    %p144 = por %p142, %p143
    %p145 = scmp.ne.s32.totalorder %s134, %s135
    %p146 = scmp.eq.s32.totalorder %s16, 0
    %p147 = por %p145, %p146
    %p148 = scmp.ne.s32.totalorder %s134, %s135
    %p149 = scmp.eq.s32.totalorder %s17, 1
    %p150 = por %p148, %p149
    %p152 = scmp.ne.s32.totalorder %s135, %s151
    %p153 = scmp.eq.s32.totalorder %s17, 0
    %p154 = por %p152, %p153
    %p155 = scmp.le.s32.totalorder 1, %s11
    %p156 = scmp.lt.s32.totalorder %s11, 3
    %p157 = pnand %p155, %p156
    %p158 = pneg %p157
    // Predicated region
    $region9: #{mlp_pallas.1} parent=5 // pred_check
      _
    $region10: #{mlp_pallas.1} parent=5 // pred_check_branch
      %160 = sbr.rel (%p157) target = $region12
    $region11: #{mlp_pallas.1} parent=5 // pred_region
      %s161 = ssub.s32 %s11, 1
      // Predicated region
      $region13: #{mlp_pallas.1} parent=11 // pred_check
        %p162 = pneg %p58
      $region14: #{mlp_pallas.1} parent=11 // pred_check_branch
        %164 = sbr.rel (%p162) target = $region16
      $region15: #{mlp_pallas.1} parent=11 // pred_region
        _
      $region16: #{mlp_pallas.1} parent=11 // pred_fallthru
        _
      // Predicated region
      $region17: #{mlp_pallas.1} parent=11 // pred_check
        %p165 = pneg %p79
      $region18: #{mlp_pallas.1} parent=11 // pred_check_branch
        %167 = sbr.rel (%p165) target = $region20
      $region19: #{mlp_pallas.1} parent=11 // pred_region
        _
      $region20: #{mlp_pallas.1} parent=11 // pred_fallthru
        _
      // Predicated region
      $region21: #{mlp_pallas.1} parent=11 // pred_check
        %p168 = pneg %p100
      $region22: #{mlp_pallas.1} parent=11 // pred_check_branch
        %170 = sbr.rel (%p168) target = $region24
      $region23: #{mlp_pallas.1} parent=11 // pred_region
        _
      $region24: #{mlp_pallas.1} parent=11 // pred_fallthru
        _
      // Predicated region
      $region25: #{mlp_pallas.1} parent=11 // pred_check
        %p171 = pneg %p121
      $region26: #{mlp_pallas.1} parent=11 // pred_check_branch
        %173 = sbr.rel (%p171) target = $region28
      $region27: #{mlp_pallas.1} parent=11 // pred_region
        _
      $region28: #{mlp_pallas.1} parent=11 // pred_fallthru
        _
    $region12: #{mlp_pallas.1} parent=5 // pred_fallthru
      _
    %p174 = scmp.lt.s32.totalorder %s11, 2
    // Predicated region
    $region29: #{mlp_pallas.1} parent=5 // pred_check
      %p175 = pneg %p174
    $region30: #{mlp_pallas.1} parent=5 // pred_check_branch
      %177 = sbr.rel (%p175) target = $region32
    $region31: #{mlp_pallas.1} parent=5 // pred_region
      // Predicated region
      $region33: #{mlp_pallas.1} parent=31 // pred_check
        %p178 = pneg %p31
      $region34: #{mlp_pallas.1} parent=31 // pred_check_branch
        %180 = sbr.rel (%p178) target = $region36
      $region35: #{mlp_pallas.1} parent=31 // pred_region
        %p181 = scmp.lt.s32.totalorder %s11, 1
        %s182 = scalar_select %p181, %s11, 1
        %s183 = smul.addr %s182, 4
        %s184 = scalar_lea.vmem %s0, %s183
      $region36: #{mlp_pallas.1} parent=31 // pred_fallthru
        _
    $region32: #{mlp_pallas.1} parent=5 // pred_fallthru
      _
    %p185 = scmp.le.s32.totalorder 1, %s11
    %p186 = scmp.lt.s32.totalorder %s11, 3
    %p187 = pnand %p185, %p186
    %p188 = pneg %p187
    // Predicated region
    $region37: #{mlp_pallas.1} parent=5 // pred_check
      _
    $region38: #{mlp_pallas.1} parent=5 // pred_check_branch
      %190 = sbr.rel (%p187) target = $region40
    $region39: #{mlp_pallas.1} parent=5 // pred_region
      %s191 = ssub.s32 %s11, 1
      %p192 = scmp.lt.s32.totalorder %s16, 1
      %s193 = scalar_select %p192, %s16, 1
      %s194 = smul.addr %s193, 4
      %s195 = scalar_lea.vmem %s0, %s194
      %p196 = pneg %p37
      %p197 = pneg %p34
      %p198 = pneg %p58
      %p199 = pneg %p55
      %p200 = pneg %p79
      %p201 = pneg %p76
      %p202 = pneg %p100
      %p203 = pneg %p97
      %p204 = pneg %p121
      %p205 = pneg %p118
      %p206 = pneg %p147
      %p207 = pneg %p144
      %p208 = scmp.lt.s32.totalorder %s16, 1
      %s209 = scalar_select %p208, %s16, 1
      %s210 = smul.addr %s209, 8
      %s211 = scalar_lea.vmem %s5, %s210
      %p212 = scmp.lt.s32.totalorder %s16, 1
      %s213 = scalar_select %p212, %s16, 1
      %s214 = smul.addr %s213, 4
      %s215 = scalar_lea.vmem %s0, %s214
      %p216 = scmp.lt.s32.totalorder %s16, 1
      %s217 = scalar_select %p216, %s16, 1
      %s218 = smul.addr %s217, 8
      %s219 = scalar_lea.vmem %s5, %s218
      %v221 = vld [vmem:[%s215] sm:$0xf]
      %v222 = vld [vmem:[%s1] sm:$0xf]
      %v223 = vld [vmem:[%s1 + $0x4] sm:$0xf]
      %v224 = vld [vmem:[%s1 + $0x8] sm:$0xf]
      %v225 = vld [vmem:[%s1 + $0xc] sm:$0xf]
      %v226 = vld [vmem:[%s1 + $0x10] sm:$0xf]
      %v227 = vld [vmem:[%s1 + $0x14] sm:$0xf]
      %v228 = vld [vmem:[%s1 + $0x18] sm:$0xf]
      %v229 = vld [vmem:[%s1 + $0x1c] sm:$0xf]
      %v230 = vld [vmem:[%s1 + $0x20] sm:$0xf]
      %v231 = vld [vmem:[%s1 + $0x24] sm:$0xf]
      %v232 = vld [vmem:[%s1 + $0x28] sm:$0xf]
      %v233 = vld [vmem:[%s1 + $0x2c] sm:$0xf]
      %v234 = vld [vmem:[%s1 + $0x30] sm:$0xf]
      %v235 = vld [vmem:[%s1 + $0x34] sm:$0xf]
      %v236 = vld [vmem:[%s1 + $0x38] sm:$0xf]
      %v237 = vld [vmem:[%s1 + $0x3c] sm:$0xf]
      %v238 = vld [vmem:[%s2] sm:$0x1]
      %v240 = vlaneseq
      %v241 = vshrl.u32 %v240, 7
      %v242 = vsub.s32 0, %v241
      %v243 = vrot.slane %v238, %v242
      %v261 = vunpack.c.l.b16 %v222
      %v262 = vunpack.c.l.b16 %v223
      %v263 = vunpack.c.l.b16 %v224
      %v264 = vunpack.c.l.b16 %v225
      %v265 = vunpack.c.l.b16 %v226
      %v266 = vunpack.c.l.b16 %v227
      %v267 = vunpack.c.l.b16 %v228
      %v268 = vunpack.c.l.b16 %v229
      %v269 = vunpack.c.l.b16 %v230
      %v270 = vunpack.c.l.b16 %v231
      %v271 = vunpack.c.l.b16 %v232
      %v272 = vunpack.c.l.b16 %v233
      %v273 = vunpack.c.l.b16 %v234
      %v274 = vunpack.c.l.b16 %v235
      %v275 = vunpack.c.l.b16 %v236
      %v276 = vunpack.c.l.b16 %v237
      %v277 = vpack.c.b16 %v262, %v261
      %v278 = vpack.c.b16 %v264, %v263
      %v279 = vpack.c.b16 %v266, %v265
      %v280 = vpack.c.b16 %v268, %v267
      %v281 = vpack.c.b16 %v270, %v269
      %v282 = vpack.c.b16 %v272, %v271
      %v283 = vpack.c.b16 %v274, %v273
      %v284 = vpack.c.b16 %v276, %v275
      %293 = vmatprep.subr.bf16.mxu0 0
      %294 = vmatpush1.bf16.msra.mxu0 %v277
      %295 = vmatprep.subr.bf16.mxu0 0
      %296 = vmatpush1.bf16.msra.mxu0 %v278
      %297 = vmatprep.subr.bf16.mxu0 0
      %298 = vmatpush1.bf16.msra.mxu0 %v279
      %299 = vmatprep.subr.bf16.mxu0 0
      %300 = vmatpush1.bf16.msra.mxu0 %v280
      %301 = vmatprep.subr.bf16.mxu0 0
      %302 = vmatpush1.bf16.msra.mxu0 %v281
      %303 = vmatprep.subr.bf16.mxu0 0
      %304 = vmatpush1.bf16.msra.mxu0 %v282
      %305 = vmatprep.subr.bf16.mxu0 0
      %306 = vmatpush1.bf16.msra.mxu0 %v283
      %307 = vmatprep.subr.bf16.mxu0 0
      %308 = vmatpush1.bf16.msra.mxu0 %v284
      %309 = vmatprep.subr.bf16.mxu0 0
      %310 = vmatpush1.bf16.msra.mxu0 0
      %311 = vmatprep.subr.bf16.mxu0 0
      %312 = vmatpush1.bf16.msra.mxu0 0
      %313 = vmatprep.subr.bf16.mxu0 0
      %314 = vmatpush1.bf16.msra.mxu0 0
      %315 = vmatprep.subr.bf16.mxu0 0
      %316 = vmatpush1.bf16.msra.mxu0 0
      %317 = vmatprep.subr.bf16.mxu0 0
      %318 = vmatpush1.bf16.msra.mxu0 0
      %319 = vmatprep.subr.bf16.mxu0 0
      %320 = vmatpush1.bf16.msra.mxu0 0
      %321 = vmatprep.subr.bf16.mxu0 0
      %322 = vmatpush1.bf16.msra.mxu0 0
      %323 = vmatprep.subr.bf16.mxu0 0
      %324 = vmatpush1.bf16.msra.mxu0 0
      %325 = vmatprep.mubr.bf16.mxu0 0
      %326 = vmatmul.mubr.bf16.gmra.mrb[0].mxu0 %v221
      %v327 = vpop.f32.mrb[0].mxu0
      %v328 = vadd.f32 %v243, %v327
      %v329 = vpop.f32.mrb[0].mxu0
      %v330 = vpop.f32.mrb[0].mxu0
      %v331 = vpop.f32.mrb[0].mxu0
      %332 = vdwg.mxu0
      %v333 = vmul.f32 %v328, %v328
      %v334 = vmul.f32 %v328, %v333
      %v335 = vmul.f32 %v334, 0.044715
      %v336 = vadd.f32 %v328, %v335
      %v337 = vmul.f32 %v336, 0.7978846
      %v338 = vtanh.pop %v337
      %v339 = vadd.f32 %v338, 1.0
      %v340 = vmul.f32 %v339, 0.5
      %v341 = vmul.f32 %v328, %v340
      %v342 = vpack.c.bf16 %v341, %v341
      %v343 = vld [vmem:[%s3] sm:$0xf]
      %v344 = vld [vmem:[%s3 + $0x4] sm:$0xf]
      %v345 = vld [vmem:[%s3 + $0x8] sm:$0xf]
      %v346 = vld [vmem:[%s3 + $0xc] sm:$0xf]
      %v347 = vld [vmem:[%s3 + $0x10] sm:$0xf]
      %v348 = vld [vmem:[%s3 + $0x14] sm:$0xf]
      %v349 = vld [vmem:[%s3 + $0x18] sm:$0xf]
      %v350 = vld [vmem:[%s3 + $0x1c] sm:$0xf]
      %v351 = vld [vmem:[%s3 + $0x20] sm:$0xf]
      %v352 = vld [vmem:[%s3 + $0x24] sm:$0xf]
      %v353 = vld [vmem:[%s3 + $0x28] sm:$0xf]
      %v354 = vld [vmem:[%s3 + $0x2c] sm:$0xf]
      %v355 = vld [vmem:[%s3 + $0x30] sm:$0xf]
      %v356 = vld [vmem:[%s3 + $0x34] sm:$0xf]
      %v357 = vld [vmem:[%s3 + $0x38] sm:$0xf]
      %v358 = vld [vmem:[%s3 + $0x3c] sm:$0xf]
      %v359 = vld [vmem:[%s4] sm:$0x1]
      %v361 = vlaneseq
      %v362 = vshrl.u32 %v361, 7
      %v363 = vsub.s32 0, %v362
      %v364 = vrot.slane %v359, %v363
      %v382 = vunpack.c.l.b16 %v343
      %v383 = vunpack.c.l.b16 %v344
      %v384 = vunpack.c.l.b16 %v345
      %v385 = vunpack.c.l.b16 %v346
      %v386 = vunpack.c.l.b16 %v347
      %v387 = vunpack.c.l.b16 %v348
      %v388 = vunpack.c.l.b16 %v349
      %v389 = vunpack.c.l.b16 %v350
      %v390 = vunpack.c.l.b16 %v351
      %v391 = vunpack.c.l.b16 %v352
      %v392 = vunpack.c.l.b16 %v353
      %v393 = vunpack.c.l.b16 %v354
      %v394 = vunpack.c.l.b16 %v355
      %v395 = vunpack.c.l.b16 %v356
      %v396 = vunpack.c.l.b16 %v357
      %v397 = vunpack.c.l.b16 %v358
      %v398 = vpack.c.b16 %v383, %v382
      %v399 = vpack.c.b16 %v385, %v384
      %v400 = vpack.c.b16 %v387, %v386
      %v401 = vpack.c.b16 %v389, %v388
      %v402 = vpack.c.b16 %v391, %v390
      %v403 = vpack.c.b16 %v393, %v392
      %v404 = vpack.c.b16 %v395, %v394
      %v405 = vpack.c.b16 %v397, %v396
      %414 = vmatprep.subr.bf16.mxu0 0
      %415 = vmatpush1.bf16.msra.mxu0 %v398
      %416 = vmatprep.subr.bf16.mxu0 0
      %417 = vmatpush1.bf16.msra.mxu0 %v399
      %418 = vmatprep.subr.bf16.mxu0 0
      %419 = vmatpush1.bf16.msra.mxu0 %v400
      %420 = vmatprep.subr.bf16.mxu0 0
      %421 = vmatpush1.bf16.msra.mxu0 %v401
      %422 = vmatprep.subr.bf16.mxu0 0
      %423 = vmatpush1.bf16.msra.mxu0 %v402
      %424 = vmatprep.subr.bf16.mxu0 0
      %425 = vmatpush1.bf16.msra.mxu0 %v403
      %426 = vmatprep.subr.bf16.mxu0 0
      %427 = vmatpush1.bf16.msra.mxu0 %v404
      %428 = vmatprep.subr.bf16.mxu0 0
      %429 = vmatpush1.bf16.msra.mxu0 %v405
      %430 = vmatprep.subr.bf16.mxu0 0
      %431 = vmatpush1.bf16.msra.mxu0 0
      %432 = vmatprep.subr.bf16.mxu0 0
      %433 = vmatpush1.bf16.msra.mxu0 0
      %434 = vmatprep.subr.bf16.mxu0 0
      %435 = vmatpush1.bf16.msra.mxu0 0
      %436 = vmatprep.subr.bf16.mxu0 0
      %437 = vmatpush1.bf16.msra.mxu0 0
      %438 = vmatprep.subr.bf16.mxu0 0
      %439 = vmatpush1.bf16.msra.mxu0 0
      %440 = vmatprep.subr.bf16.mxu0 0
      %441 = vmatpush1.bf16.msra.mxu0 0
      %442 = vmatprep.subr.bf16.mxu0 0
      %443 = vmatpush1.bf16.msra.mxu0 0
      %444 = vmatprep.subr.bf16.mxu0 0
      %445 = vmatpush1.bf16.msra.mxu0 0
      %446 = vmatprep.mubr.bf16.mxu0 0
      %447 = vmatmul.mubr.bf16.gmra.mrb[0].mxu0 %v342
      %v448 = vpop.f32.mrb[0].mxu0
      %v449 = vadd.f32 %v364, %v448
      %v450 = vpop.f32.mrb[0].mxu0
      %v451 = vpop.f32.mrb[0].mxu0
      %v452 = vpop.f32.mrb[0].mxu0
      %453 = vdwg.mxu0
      %454 = vst [vmem:[%s219] sm:$0xff] %v449
      %p455 = scmp.lt.s32.totalorder %s16, 1
      %s456 = scalar_select %p455, %s16, 1
      %s457 = smul.addr %s456, 8
      %s458 = scalar_lea.vmem %s5, %s457
      // Predicated region
      $region41: #{mlp_pallas.1} parent=39 // pred_check
        %p459 = pneg %p144
      $region42: #{mlp_pallas.1} parent=39 // pred_check_branch
        %461 = sbr.rel (%p459) target = $region44
      $region43: #{mlp_pallas.1} parent=39 // pred_region
        _
      $region44: #{mlp_pallas.1} parent=39 // pred_fallthru
        _
    $region40: #{mlp_pallas.1} parent=5 // pred_fallthru
      _
    %p462 = scmp.le.s32.totalorder 2, %s11
    // Predicated region
    $region45: #{mlp_pallas.1} parent=5 // pred_check
      %p463 = pneg %p462
    $region46: #{mlp_pallas.1} parent=5 // pred_check_branch
      %465 = sbr.rel (%p463) target = $region48
    $region47: #{mlp_pallas.1} parent=5 // pred_region
      %s466 = ssub.s32 %s11, 2
      // Predicated region
      $region49: #{mlp_pallas.1} parent=47 // pred_check
        %p467 = pneg %p150
      $region50: #{mlp_pallas.1} parent=47 // pred_check_branch
        %469 = sbr.rel (%p467) target = $region52
      $region51: #{mlp_pallas.1} parent=47 // pred_region
        %p470 = scmp.lt.s32.totalorder %s17, 1
        %s471 = scalar_select %p470, %s17, 1
        %s472 = smul.addr %s471, 8
        %s473 = scalar_lea.vmem %s5, %s472
      $region52: #{mlp_pallas.1} parent=47 // pred_fallthru
        _
    $region48: #{mlp_pallas.1} parent=5 // pred_fallthru
      _
  $region6: #{mlp_pallas.1} parent=0 // loop_footer
    %s15 = sadd.s32 1, %s11
  $region7: #{mlp_pallas.1} parent=0 // loop_footer_branch
    %10 = sbr.rel target = $region3
  $region8: #{mlp_pallas.1} parent=0 // loop_exit
    _

</llo_original>
